<compile_context>
chip_gen: v5e
topology: v5e:2x2
jax: 0.10.0
libtpu: 0.0.40
codegen_flags: <defaults>
</compile_context>

<pallas_src>
import functools

import jax
import jax.numpy as jnp
from jax import lax
from jax.experimental import pallas as pl
from jax.experimental.pallas import tpu as pltpu


def rnn_kernel(u_ref, whh0_ref, w1_ref, b1_ref, hout_ref):
    """Runs the full 2-layer tanh recurrence over T steps in one invocation.

    u_ref   : (T, B, H)  precomputed x_t @ Wih0^T + (b_ih0 + b_hh0), time-major
    whh0_ref: (H, H)     layer-0 recurrent weight, transposed
    w1_ref  : (2H, H)    concat([Wih1^T, Whh1^T], axis=0)
    b1_ref  : (1, H)     b_ih1 + b_hh1
    hout_ref: (B, H)     last-layer hidden state at the final time step
    """
    T, B, H = u_ref.shape

    # Hoist constant loads / broadcasts out of the time loop.
    whh0 = whh0_ref[...]                               # (H, H)
    w1 = w1_ref[...]                                   # (2H, H)
    b1 = jnp.broadcast_to(b1_ref[...], (B, H))         # (B, H)

    def step(t, carry):
        h0, h1 = carry
        u_t = u_ref[t]                                  # (B, H)
        # layer 0: tanh(x_t Wih0^T + b0 + h0 Whh0^T)   (input proj precomputed)
        h0n = jnp.tanh(
            u_t + jnp.dot(h0, whh0, preferred_element_type=jnp.float32))
        # layer 1: tanh([h0n | h1] @ [[Wih1^T];[Whh1^T]] + b1)  (single K=2H pass)
        h01 = jnp.concatenate([h0n, h1], axis=-1)       # (B, 2H)
        h1n = jnp.tanh(
            jnp.dot(h01, w1, preferred_element_type=jnp.float32) + b1)
        return h0n, h1n

    h_init = (jnp.zeros((B, H), jnp.float32), jnp.zeros((B, H), jnp.float32))
    # T is static and small -> fully unroll so every MXU/VPU op is scheduled
    # in one straight-line region.
    _, h1_final = lax.fori_loop(0, T, step, h_init, unroll=True)
    hout_ref[...] = h1_final


@functools.partial(jax.jit, static_argnames=())
def rnn_model_forward(x, params):
    """x: (B, T, D) float32, batch_first like the PyTorch module. Returns (B, O)."""
    B, T, D = x.shape
    H = params["whh0"].shape[0]

    # Pad batch up to the 8-row sublane width.
    Bp = ((B + 7) // 8) * 8
    if Bp != B:
        x = jnp.pad(x, ((0, Bp - B), (0, 0), (0, 0)))

    # Hoisted layer-0 input projection for all time steps: one dense matmul,
    # produced time-major so the kernel reads a contiguous (Bp, H) slab per step.
    b0 = params["bih0"] + params["bhh0"]                          # (H,)
    u = jnp.einsum("btd,hd->tbh", x, params["wih0"]) + b0         # (T, Bp, H)

    whh0_T = params["whh0"].T                                     # (H, H)
    w1_cat = jnp.concatenate(
        [params["wih1"].T, params["whh1"].T], axis=0)             # (2H, H)
    b1 = (params["bih1"] + params["bhh1"]).reshape(1, H)          # (1, H)

    h_last = pl.pallas_call(
        rnn_kernel,
        out_shape=jax.ShapeDtypeStruct((Bp, H), jnp.float32),
        grid_spec=pltpu.PrefetchScalarGridSpec(
            num_scalar_prefetch=0,
            grid=(1,),  # single invocation; recurrence lives inside the kernel
            in_specs=[
                pl.BlockSpec((T, Bp, H), lambda i: (0, 0, 0)),
                pl.BlockSpec((H, H), lambda i: (0, 0)),
                pl.BlockSpec((2 * H, H), lambda i: (0, 0)),
                pl.BlockSpec((1, H), lambda i: (0, 0)),
            ],
            out_specs=pl.BlockSpec((Bp, H), lambda i: (0, 0)),
        ),
        compiler_params=pltpu.CompilerParams(
            dimension_semantics=("arbitrary",)),
    )(u, whh0_T, w1_cat, b1)

    # fc on hn[-1] in the wrapper (O=1 output would force masked stores in-kernel);
    # fused with the pallas_call by XLA under jit.
    out = h_last[:B] @ params["wfc"].T + params["bfc"]            # (B, O)
    return out


def init_params(key, input_dim, hidden_dim, output_dim):
    """Deterministic init mimicking PyTorch's U(-1/sqrt(H), 1/sqrt(H))."""
    ks = jax.random.split(key, 11)
    kr = 1.0 / jnp.sqrt(hidden_dim)
    kf = 1.0 / jnp.sqrt(hidden_dim)  # fc fan_in = hidden_dim
    u = lambda k, shape, b: jax.random.uniform(k, shape, jnp.float32, -b, b)
    return {
        "wih0": u(ks[0], (hidden_dim, input_dim), kr),
        "whh0": u(ks[1], (hidden_dim, hidden_dim), kr),
        "bih0": u(ks[2], (hidden_dim,), kr),
        "bhh0": u(ks[3], (hidden_dim,), kr),
        "wih1": u(ks[4], (hidden_dim, hidden_dim), kr),
        "whh1": u(ks[5], (hidden_dim, hidden_dim), kr),
        "bih1": u(ks[6], (hidden_dim,), kr),
        "bhh1": u(ks[7], (hidden_dim,), kr),
        "wfc":  u(ks[8], (output_dim, hidden_dim), kf),
        "bfc":  u(ks[9], (output_dim,), kf),
    }


def reference_forward(x, p):
    """Pure-JAX reference of the PyTorch forward, for verification."""
    B, T, D = x.shape
    H = p["whh0"].shape[0]
    h0 = jnp.zeros((B, H), jnp.float32)
    h1 = jnp.zeros((B, H), jnp.float32)
    for t in range(T):
        xt = x[:, t, :]
        h0 = jnp.tanh(xt @ p["wih0"].T + p["bih0"] + h0 @ p["whh0"].T + p["bhh0"])
        h1 = jnp.tanh(h0 @ p["wih1"].T + p["bih1"] + h1 @ p["whh1"].T + p["bhh1"])
    return h1 @ p["wfc"].T + p["bfc"]


if __name__ == "__main__":
    B, T, D, H, O = 2, 8, 4, 64, 1  # batch, seq, input_dim, hidden_dim, output_dim

    key = jax.random.PRNGKey(0)
    kx, kp = jax.random.split(key)
    x = jax.random.normal(kx, (B, T, D), jnp.float32)
    params = init_params(kp, D, H, O)

    out = rnn_model_forward(x, params)
    out = jax.block_until_ready(out)

    ref = reference_forward(x, params)
    assert out.shape == (B, O)
    assert jnp.allclose(out, ref, atol=1e-5, rtol=1e-5), (out, ref)

    print("KERNEL_OK")
</pallas_src>

<mosaic_0001>
module attributes {stable_mosaic.version = 11 : i64} {
  func.func @rnn_kernel(%arg0: i32, %arg1: memref<8x8x64xf32, #tpu.memory_space<vmem>>, %arg2: memref<64x64xf32, #tpu.memory_space<vmem>>, %arg3: memref<128x64xf32, #tpu.memory_space<vmem>>, %arg4: memref<1x64xf32, #tpu.memory_space<vmem>>, %arg5: memref<8x64xf32, #tpu.memory_space<vmem>>) attributes {dimension_semantics = [#tpu.dimension_semantics<arbitrary>], iteration_bounds = array<i64: 1>, scalar_prefetch = 0 : i64, scratch_operands = 0 : i64, tpu.core_type = #tpu.core_type<tc>, window_params = [{pipeline_mode = #tpu.pipeline_mode<synchronous>, transform_indices = @transform_0, window_bounds = array<i64: 8, 8, 64>}, {pipeline_mode = #tpu.pipeline_mode<synchronous>, transform_indices = @transform_1, window_bounds = array<i64: 64, 64>}, {pipeline_mode = #tpu.pipeline_mode<synchronous>, transform_indices = @transform_2, window_bounds = array<i64: 128, 64>}, {pipeline_mode = #tpu.pipeline_mode<synchronous>, transform_indices = @transform_3, window_bounds = array<i64: 1, 64>}, {pipeline_mode = #tpu.pipeline_mode<synchronous>, transform_indices = @transform_4, window_bounds = array<i64: 8, 64>}]} {
    %c0 = arith.constant 0 : index
    %c0_0 = arith.constant 0 : index
    %0 = vector.load %arg2[%c0, %c0_0] : memref<64x64xf32, #tpu.memory_space<vmem>>, vector<64x64xf32>
    %c0_1 = arith.constant 0 : index
    %c0_2 = arith.constant 0 : index
    %1 = vector.load %arg3[%c0_1, %c0_2] : memref<128x64xf32, #tpu.memory_space<vmem>>, vector<128x64xf32>
    %c0_3 = arith.constant 0 : index
    %c0_4 = arith.constant 0 : index
    %2 = vector.load %arg4[%c0_3, %c0_4] : memref<1x64xf32, #tpu.memory_space<vmem>>, vector<1x64xf32>
    %3 = vector.shape_cast %2 : vector<1x64xf32> to vector<1x64xf32>
    %4 = vector.broadcast %3 : vector<1x64xf32> to vector<8x64xf32>
    %cst = arith.constant 0.000000e+00 : f32
    %5 = vector.broadcast %cst : f32 to vector<8x64xf32>
    %cst_5 = arith.constant 0.000000e+00 : f32
    %6 = vector.broadcast %cst_5 : f32 to vector<8x64xf32>
    %c0_i32 = arith.constant 0 : i32
    %7 = arith.index_cast %c0_i32 : i32 to index
    %c0_6 = arith.constant 0 : index
    %c0_7 = arith.constant 0 : index
    %8 = vector.load %arg1[%7, %c0_6, %c0_7] : memref<8x8x64xf32, #tpu.memory_space<vmem>>, vector<1x8x64xf32>
    %9 = vector.shape_cast %8 : vector<1x8x64xf32> to vector<8x64xf32>
    %cst_8 = arith.constant dense<0.000000e+00> : vector<8x64xf32>
    %10 = tpu.matmul %5, %0, %cst_8 {dimension_numbers = #tpu.dot_dimension_numbers<[1], [0], [0], [1], [0, 0, 1, 1], [], []>} : vector<8x64xf32>, vector<64x64xf32>, vector<8x64xf32> -> vector<8x64xf32>
    %11 = arith.addf %9, %10 : vector<8x64xf32>
    %12 = math.tanh %11 : vector<8x64xf32>
    %13 = tpu.concatenate %12, %6 in 1 : vector<8x64xf32>, vector<8x64xf32> -> vector<8x128xf32>
    %cst_9 = arith.constant dense<0.000000e+00> : vector<8x64xf32>
    %14 = tpu.matmul %13, %1, %cst_9 {dimension_numbers = #tpu.dot_dimension_numbers<[1], [0], [0], [1], [0, 0, 1, 1], [], []>} : vector<8x128xf32>, vector<128x64xf32>, vector<8x64xf32> -> vector<8x64xf32>
    %15 = arith.addf %14, %4 : vector<8x64xf32>
    %16 = math.tanh %15 : vector<8x64xf32>
    %c1_i32 = arith.constant 1 : i32
    %17 = arith.index_cast %c1_i32 : i32 to index
    %c0_10 = arith.constant 0 : index
    %c0_11 = arith.constant 0 : index
    %18 = vector.load %arg1[%17, %c0_10, %c0_11] : memref<8x8x64xf32, #tpu.memory_space<vmem>>, vector<1x8x64xf32>
    %19 = vector.shape_cast %18 : vector<1x8x64xf32> to vector<8x64xf32>
    %cst_12 = arith.constant dense<0.000000e+00> : vector<8x64xf32>
    %20 = tpu.matmul %12, %0, %cst_12 {dimension_numbers = #tpu.dot_dimension_numbers<[1], [0], [0], [1], [0, 0, 1, 1], [], []>} : vector<8x64xf32>, vector<64x64xf32>, vector<8x64xf32> -> vector<8x64xf32>
    %21 = arith.addf %19, %20 : vector<8x64xf32>
    %22 = math.tanh %21 : vector<8x64xf32>
    %23 = tpu.concatenate %22, %16 in 1 : vector<8x64xf32>, vector<8x64xf32> -> vector<8x128xf32>
    %cst_13 = arith.constant dense<0.000000e+00> : vector<8x64xf32>
    %24 = tpu.matmul %23, %1, %cst_13 {dimension_numbers = #tpu.dot_dimension_numbers<[1], [0], [0], [1], [0, 0, 1, 1], [], []>} : vector<8x128xf32>, vector<128x64xf32>, vector<8x64xf32> -> vector<8x64xf32>
    %25 = arith.addf %24, %4 : vector<8x64xf32>
    %26 = math.tanh %25 : vector<8x64xf32>
    %c2_i32 = arith.constant 2 : i32
    %27 = arith.index_cast %c2_i32 : i32 to index
    %c0_14 = arith.constant 0 : index
    %c0_15 = arith.constant 0 : index
    %28 = vector.load %arg1[%27, %c0_14, %c0_15] : memref<8x8x64xf32, #tpu.memory_space<vmem>>, vector<1x8x64xf32>
    %29 = vector.shape_cast %28 : vector<1x8x64xf32> to vector<8x64xf32>
    %cst_16 = arith.constant dense<0.000000e+00> : vector<8x64xf32>
    %30 = tpu.matmul %22, %0, %cst_16 {dimension_numbers = #tpu.dot_dimension_numbers<[1], [0], [0], [1], [0, 0, 1, 1], [], []>} : vector<8x64xf32>, vector<64x64xf32>, vector<8x64xf32> -> vector<8x64xf32>
    %31 = arith.addf %29, %30 : vector<8x64xf32>
    %32 = math.tanh %31 : vector<8x64xf32>
    %33 = tpu.concatenate %32, %26 in 1 : vector<8x64xf32>, vector<8x64xf32> -> vector<8x128xf32>
    %cst_17 = arith.constant dense<0.000000e+00> : vector<8x64xf32>
    %34 = tpu.matmul %33, %1, %cst_17 {dimension_numbers = #tpu.dot_dimension_numbers<[1], [0], [0], [1], [0, 0, 1, 1], [], []>} : vector<8x128xf32>, vector<128x64xf32>, vector<8x64xf32> -> vector<8x64xf32>
    %35 = arith.addf %34, %4 : vector<8x64xf32>
    %36 = math.tanh %35 : vector<8x64xf32>
    %c3_i32 = arith.constant 3 : i32
    %37 = arith.index_cast %c3_i32 : i32 to index
    %c0_18 = arith.constant 0 : index
    %c0_19 = arith.constant 0 : index
    %38 = vector.load %arg1[%37, %c0_18, %c0_19] : memref<8x8x64xf32, #tpu.memory_space<vmem>>, vector<1x8x64xf32>
    %39 = vector.shape_cast %38 : vector<1x8x64xf32> to vector<8x64xf32>
    %cst_20 = arith.constant dense<0.000000e+00> : vector<8x64xf32>
    %40 = tpu.matmul %32, %0, %cst_20 {dimension_numbers = #tpu.dot_dimension_numbers<[1], [0], [0], [1], [0, 0, 1, 1], [], []>} : vector<8x64xf32>, vector<64x64xf32>, vector<8x64xf32> -> vector<8x64xf32>
    %41 = arith.addf %39, %40 : vector<8x64xf32>
    %42 = math.tanh %41 : vector<8x64xf32>
    %43 = tpu.concatenate %42, %36 in 1 : vector<8x64xf32>, vector<8x64xf32> -> vector<8x128xf32>
    %cst_21 = arith.constant dense<0.000000e+00> : vector<8x64xf32>
    %44 = tpu.matmul %43, %1, %cst_21 {dimension_numbers = #tpu.dot_dimension_numbers<[1], [0], [0], [1], [0, 0, 1, 1], [], []>} : vector<8x128xf32>, vector<128x64xf32>, vector<8x64xf32> -> vector<8x64xf32>
    %45 = arith.addf %44, %4 : vector<8x64xf32>
    %46 = math.tanh %45 : vector<8x64xf32>
    %c4_i32 = arith.constant 4 : i32
    %47 = arith.index_cast %c4_i32 : i32 to index
    %c0_22 = arith.constant 0 : index
    %c0_23 = arith.constant 0 : index
    %48 = vector.load %arg1[%47, %c0_22, %c0_23] : memref<8x8x64xf32, #tpu.memory_space<vmem>>, vector<1x8x64xf32>
    %49 = vector.shape_cast %48 : vector<1x8x64xf32> to vector<8x64xf32>
    %cst_24 = arith.constant dense<0.000000e+00> : vector<8x64xf32>
    %50 = tpu.matmul %42, %0, %cst_24 {dimension_numbers = #tpu.dot_dimension_numbers<[1], [0], [0], [1], [0, 0, 1, 1], [], []>} : vector<8x64xf32>, vector<64x64xf32>, vector<8x64xf32> -> vector<8x64xf32>
    %51 = arith.addf %49, %50 : vector<8x64xf32>
    %52 = math.tanh %51 : vector<8x64xf32>
    %53 = tpu.concatenate %52, %46 in 1 : vector<8x64xf32>, vector<8x64xf32> -> vector<8x128xf32>
    %cst_25 = arith.constant dense<0.000000e+00> : vector<8x64xf32>
    %54 = tpu.matmul %53, %1, %cst_25 {dimension_numbers = #tpu.dot_dimension_numbers<[1], [0], [0], [1], [0, 0, 1, 1], [], []>} : vector<8x128xf32>, vector<128x64xf32>, vector<8x64xf32> -> vector<8x64xf32>
    %55 = arith.addf %54, %4 : vector<8x64xf32>
    %56 = math.tanh %55 : vector<8x64xf32>
    %c5_i32 = arith.constant 5 : i32
    %57 = arith.index_cast %c5_i32 : i32 to index
    %c0_26 = arith.constant 0 : index
    %c0_27 = arith.constant 0 : index
    %58 = vector.load %arg1[%57, %c0_26, %c0_27] : memref<8x8x64xf32, #tpu.memory_space<vmem>>, vector<1x8x64xf32>
    %59 = vector.shape_cast %58 : vector<1x8x64xf32> to vector<8x64xf32>
    %cst_28 = arith.constant dense<0.000000e+00> : vector<8x64xf32>
    %60 = tpu.matmul %52, %0, %cst_28 {dimension_numbers = #tpu.dot_dimension_numbers<[1], [0], [0], [1], [0, 0, 1, 1], [], []>} : vector<8x64xf32>, vector<64x64xf32>, vector<8x64xf32> -> vector<8x64xf32>
    %61 = arith.addf %59, %60 : vector<8x64xf32>
    %62 = math.tanh %61 : vector<8x64xf32>
    %63 = tpu.concatenate %62, %56 in 1 : vector<8x64xf32>, vector<8x64xf32> -> vector<8x128xf32>
    %cst_29 = arith.constant dense<0.000000e+00> : vector<8x64xf32>
    %64 = tpu.matmul %63, %1, %cst_29 {dimension_numbers = #tpu.dot_dimension_numbers<[1], [0], [0], [1], [0, 0, 1, 1], [], []>} : vector<8x128xf32>, vector<128x64xf32>, vector<8x64xf32> -> vector<8x64xf32>
    %65 = arith.addf %64, %4 : vector<8x64xf32>
    %66 = math.tanh %65 : vector<8x64xf32>
    %c6_i32 = arith.constant 6 : i32
    %67 = arith.index_cast %c6_i32 : i32 to index
    %c0_30 = arith.constant 0 : index
    %c0_31 = arith.constant 0 : index
    %68 = vector.load %arg1[%67, %c0_30, %c0_31] : memref<8x8x64xf32, #tpu.memory_space<vmem>>, vector<1x8x64xf32>
    %69 = vector.shape_cast %68 : vector<1x8x64xf32> to vector<8x64xf32>
    %cst_32 = arith.constant dense<0.000000e+00> : vector<8x64xf32>
    %70 = tpu.matmul %62, %0, %cst_32 {dimension_numbers = #tpu.dot_dimension_numbers<[1], [0], [0], [1], [0, 0, 1, 1], [], []>} : vector<8x64xf32>, vector<64x64xf32>, vector<8x64xf32> -> vector<8x64xf32>
    %71 = arith.addf %69, %70 : vector<8x64xf32>
    %72 = math.tanh %71 : vector<8x64xf32>
    %73 = tpu.concatenate %72, %66 in 1 : vector<8x64xf32>, vector<8x64xf32> -> vector<8x128xf32>
    %cst_33 = arith.constant dense<0.000000e+00> : vector<8x64xf32>
    %74 = tpu.matmul %73, %1, %cst_33 {dimension_numbers = #tpu.dot_dimension_numbers<[1], [0], [0], [1], [0, 0, 1, 1], [], []>} : vector<8x128xf32>, vector<128x64xf32>, vector<8x64xf32> -> vector<8x64xf32>
    %75 = arith.addf %74, %4 : vector<8x64xf32>
    %76 = math.tanh %75 : vector<8x64xf32>
    %c7_i32 = arith.constant 7 : i32
    %77 = arith.index_cast %c7_i32 : i32 to index
    %c0_34 = arith.constant 0 : index
    %c0_35 = arith.constant 0 : index
    %78 = vector.load %arg1[%77, %c0_34, %c0_35] : memref<8x8x64xf32, #tpu.memory_space<vmem>>, vector<1x8x64xf32>
    %79 = vector.shape_cast %78 : vector<1x8x64xf32> to vector<8x64xf32>
    %cst_36 = arith.constant dense<0.000000e+00> : vector<8x64xf32>
    %80 = tpu.matmul %72, %0, %cst_36 {dimension_numbers = #tpu.dot_dimension_numbers<[1], [0], [0], [1], [0, 0, 1, 1], [], []>} : vector<8x64xf32>, vector<64x64xf32>, vector<8x64xf32> -> vector<8x64xf32>
    %81 = arith.addf %79, %80 : vector<8x64xf32>
    %82 = math.tanh %81 : vector<8x64xf32>
    %83 = tpu.concatenate %82, %76 in 1 : vector<8x64xf32>, vector<8x64xf32> -> vector<8x128xf32>
    %cst_37 = arith.constant dense<0.000000e+00> : vector<8x64xf32>
    %84 = tpu.matmul %83, %1, %cst_37 {dimension_numbers = #tpu.dot_dimension_numbers<[1], [0], [0], [1], [0, 0, 1, 1], [], []>} : vector<8x128xf32>, vector<128x64xf32>, vector<8x64xf32> -> vector<8x64xf32>
    %85 = arith.addf %84, %4 : vector<8x64xf32>
    %86 = math.tanh %85 : vector<8x64xf32>
    %c8_i32 = arith.constant 8 : i32
    %c0_38 = arith.constant 0 : index
    %c0_39 = arith.constant 0 : index
    %87 = vector.load %arg5[%c0_38, %c0_39] : memref<8x64xf32, #tpu.memory_space<vmem>>, vector<8x64xf32>
    tpu.vector_store %arg5[%c0_38, %c0_39], %86 {strides = array<i32>} : memref<8x64xf32, #tpu.memory_space<vmem>>, vector<8x64xf32>,
    return
  }
  func.func @transform_0(%arg0: i32) -> (i32, i32, i32) {
    %c0_i32 = arith.constant 0 : i32
    %c0_i32_0 = arith.constant 0 : i32
    %c0_i32_1 = arith.constant 0 : i32
    %c0_i32_2 = arith.constant 0 : i32
    return %c0_i32, %c0_i32_0, %c0_i32_1 : i32, i32, i32
  }
  func.func @transform_1(%arg0: i32) -> (i32, i32) {
    %c0_i32 = arith.constant 0 : i32
    %c0_i32_0 = arith.constant 0 : i32
    %c0_i32_1 = arith.constant 0 : i32
    return %c0_i32, %c0_i32_0 : i32, i32
  }
  func.func @transform_2(%arg0: i32) -> (i32, i32) {
    %c0_i32 = arith.constant 0 : i32
    %c0_i32_0 = arith.constant 0 : i32
    %c0_i32_1 = arith.constant 0 : i32
    return %c0_i32, %c0_i32_0 : i32, i32
  }
  func.func @transform_3(%arg0: i32) -> (i32, i32) {
    %c0_i32 = arith.constant 0 : i32
    %c0_i32_0 = arith.constant 0 : i32
    %c0_i32_1 = arith.constant 0 : i32
    return %c0_i32, %c0_i32_0 : i32, i32
  }
  func.func @transform_4(%arg0: i32) -> (i32, i32) {
    %c0_i32 = arith.constant 0 : i32
    %c0_i32_0 = arith.constant 0 : i32
    %c0_i32_1 = arith.constant 0 : i32
    return %c0_i32, %c0_i32_0 : i32, i32
  }
}

</mosaic_0001>

<llo_original>
// kernel: rnn_model_forward.1
$region0: #{rnn_model_forward.1}
  #allocation0 [shape = 'u32[]', space=smem, size = 0x4, offset = 0x4, fixed_abs, tag = 'smem constant byte address 0x4 - core index']
  #allocation1 [shape = 'u32[72,128]{1,0:T(1,128)}', space=vmem, size = 0x9000, scoped, tag = 'internal scratch']
  %s0 = inlined_call_operand.vmem [shape: f32[8,8,64], index: 0, kind: input, shape index: {}]
  %s1 = inlined_call_operand.vmem [shape: f32[64,64], index: 1, kind: input, shape index: {}]
  %s2 = inlined_call_operand.vmem [shape: f32[128,64], index: 2, kind: input, shape index: {}]
  %s3 = inlined_call_operand.vmem [shape: f32[1,64], index: 3, kind: input, shape index: {}]
  %s4 = inlined_call_operand.vmem [shape: f32[8,64], index: 4, kind: output, shape index: {}]
  %s5 = sld [smem:[#allocation0]]
  $region26: #{rnn_model_forward.1} parent=0
    _
  %s7 = ssub.s32 1, %s5
  %s8 = scalar_select 0, %s7, %s5
  // Predicated region
  $region2: #{rnn_model_forward.1} parent=0 // pred_check
    _
  $region3: #{rnn_model_forward.1} parent=0 // pred_check_branch
    %10 = sbr.rel (0) target = $region5
  $region4: #{rnn_model_forward.1} parent=0 // pred_region
    _
  $region5: #{rnn_model_forward.1} parent=0 // pred_fallthru
    _
  // Predicated region
  $region6: #{rnn_model_forward.1} parent=0 // pred_check
    _
  $region7: #{rnn_model_forward.1} parent=0 // pred_check_branch
    %12 = sbr.rel (0) target = $region9
  $region8: #{rnn_model_forward.1} parent=0 // pred_region
    _
  $region9: #{rnn_model_forward.1} parent=0 // pred_fallthru
    _
  // Predicated region
  $region10: #{rnn_model_forward.1} parent=0 // pred_check
    _
  $region11: #{rnn_model_forward.1} parent=0 // pred_check_branch
    %14 = sbr.rel (0) target = $region13
  $region12: #{rnn_model_forward.1} parent=0 // pred_region
    _
  $region13: #{rnn_model_forward.1} parent=0 // pred_fallthru
    _
  // Predicated region
  $region14: #{rnn_model_forward.1} parent=0 // pred_check
    _
  $region15: #{rnn_model_forward.1} parent=0 // pred_check_branch
    %16 = sbr.rel (0) target = $region17
  $region16: #{rnn_model_forward.1} parent=0 // pred_region
    _
  $region17: #{rnn_model_forward.1} parent=0 // pred_fallthru
    _
  %v17 = vld [vmem:[%s1] sm:$0xff]
  %v18 = vld [vmem:[%s1 + $0x8] sm:$0xff]
  %v19 = vld [vmem:[%s1 + $0x10] sm:$0xff]
  %v20 = vld [vmem:[%s1 + $0x18] sm:$0xff]
  %v21 = vld [vmem:[%s1 + $0x20] sm:$0xff]
  %v22 = vld [vmem:[%s1 + $0x28] sm:$0xff]
  %v23 = vld [vmem:[%s1 + $0x30] sm:$0xff]
  %v24 = vld [vmem:[%s1 + $0x38] sm:$0xff]
  %v25 = vld [vmem:[%s2] sm:$0xff]
  %v26 = vld [vmem:[%s2 + $0x8] sm:$0xff]
  %v27 = vld [vmem:[%s2 + $0x10] sm:$0xff]
  %v28 = vld [vmem:[%s2 + $0x18] sm:$0xff]
  %v29 = vld [vmem:[%s2 + $0x20] sm:$0xff]
  %v30 = vld [vmem:[%s2 + $0x28] sm:$0xff]
  %v31 = vld [vmem:[%s2 + $0x30] sm:$0xff]
  %v32 = vld [vmem:[%s2 + $0x38] sm:$0xff]
  %v33 = vld [vmem:[%s2 + $0x40] sm:$0xff]
  %v34 = vld [vmem:[%s2 + $0x48] sm:$0xff]
  %v35 = vld [vmem:[%s2 + $0x50] sm:$0xff]
  %v36 = vld [vmem:[%s2 + $0x58] sm:$0xff]
  %v37 = vld [vmem:[%s2 + $0x60] sm:$0xff]
  %v38 = vld [vmem:[%s2 + $0x68] sm:$0xff]
  %v39 = vld [vmem:[%s2 + $0x70] sm:$0xff]
  %v40 = vld [vmem:[%s2 + $0x78] sm:$0xff]
  %v41 = vld [vmem:[%s3] sm:$0x1]
  %v43 = vperm.slane %v41, 0
  %v45 = vld [vmem:[%s0] sm:$0xff]
  %vm46 = vcmask 523264
  %v48 = vsel %vm46, 0.0, 0
  %50 = vmatpush.msra.mxu0 0.0
  %51 = vmatpush.msra.mxu0 0.0
  %52 = vmatpush.msra.mxu0 0.0
  %53 = vmatpush.msra.mxu0 0.0
  %54 = vmatpush.msra.mxu0 0.0
  %55 = vmatpush.msra.mxu0 0.0
  %56 = vmatpush.msra.mxu0 0.0
  %57 = vmatpush.msra.mxu0 0.0
  %58 = vmatpush.msra.mxu0 %v24
  %59 = vmatpush.msra.mxu0 %v23
  %60 = vmatpush.msra.mxu0 %v22
  %61 = vmatpush.msra.mxu0 %v21
  %62 = vmatpush.msra.mxu0 %v20
  %63 = vmatpush.msra.mxu0 %v19
  %64 = vmatpush.msra.mxu0 %v18
  %65 = vmatpush.msra.mxu0 %v17
  %66 = vmatmul.f32.gmra.mxu0 %v48
  %v67 = vpop.f32.mrf.mxu0
  %v68 = vadd.f32 0.0, %v67
  %69 = vdwg.mxu0
  %v70 = vadd.f32 %v45, %v68
  %v71 = vtanh.pop %v70
  %v72 = vsel %vm46, %v71, 0.0
  %73 = vmatpush.msra.mxu0 %v40
  %74 = vmatpush.msra.mxu0 %v39
  %75 = vmatpush.msra.mxu0 %v38
  %76 = vmatpush.msra.mxu0 %v37
  %77 = vmatpush.msra.mxu0 %v36
  %78 = vmatpush.msra.mxu0 %v35
  %79 = vmatpush.msra.mxu0 %v34
  %80 = vmatpush.msra.mxu0 %v33
  %81 = vmatpush.msra.mxu0 %v32
  %82 = vmatpush.msra.mxu0 %v31
  %83 = vmatpush.msra.mxu0 %v30
  %84 = vmatpush.msra.mxu0 %v29
  %85 = vmatpush.msra.mxu0 %v28
  %86 = vmatpush.msra.mxu0 %v27
  %87 = vmatpush.msra.mxu0 %v26
  %88 = vmatpush.msra.mxu0 %v25
  %89 = vmatmul.f32.gmra.mxu0 %v72
  %v90 = vpop.f32.mrf.mxu0
  %v91 = vadd.f32 %v43, %v90
  %92 = vdwg.mxu0
  %v93 = vtanh.pop %v91
  %s94 = scalar_lea.vmem %s0, 8
  %v95 = vld [vmem:[%s94] sm:$0xff]
  %v97 = vsel %vm46, %v71, 0
  %99 = vmatpush.msra.mxu0 0.0
  %100 = vmatpush.msra.mxu0 0.0
  %101 = vmatpush.msra.mxu0 0.0
  %102 = vmatpush.msra.mxu0 0.0
  %103 = vmatpush.msra.mxu0 0.0
  %104 = vmatpush.msra.mxu0 0.0
  %105 = vmatpush.msra.mxu0 0.0
  %106 = vmatpush.msra.mxu0 0.0
  %107 = vmatpush.msra.mxu0 %v24
  %108 = vmatpush.msra.mxu0 %v23
  %109 = vmatpush.msra.mxu0 %v22
  %110 = vmatpush.msra.mxu0 %v21
  %111 = vmatpush.msra.mxu0 %v20
  %112 = vmatpush.msra.mxu0 %v19
  %113 = vmatpush.msra.mxu0 %v18
  %114 = vmatpush.msra.mxu0 %v17
  %115 = vmatmul.f32.gmra.mxu0 %v97
  %v116 = vpop.f32.mrf.mxu0
  %v117 = vadd.f32 0.0, %v116
  %118 = vdwg.mxu0
  %v119 = vadd.f32 %v95, %v117
  %v120 = vtanh.pop %v119
  %122 = vrot.lane.b32.xlu0 %v93, 64
  %v123 = vpop.permute.xlu0 %122
  %v125 = vsel %vm46, %v120, %v123
  %126 = vmatpush.msra.mxu0 %v40
  %127 = vmatpush.msra.mxu0 %v39
  %128 = vmatpush.msra.mxu0 %v38
  %129 = vmatpush.msra.mxu0 %v37
  %130 = vmatpush.msra.mxu0 %v36
  %131 = vmatpush.msra.mxu0 %v35
  %132 = vmatpush.msra.mxu0 %v34
  %133 = vmatpush.msra.mxu0 %v33
  %134 = vmatpush.msra.mxu0 %v32
  %135 = vmatpush.msra.mxu0 %v31
  %136 = vmatpush.msra.mxu0 %v30
  %137 = vmatpush.msra.mxu0 %v29
  %138 = vmatpush.msra.mxu0 %v28
  %139 = vmatpush.msra.mxu0 %v27
  %140 = vmatpush.msra.mxu0 %v26
  %141 = vmatpush.msra.mxu0 %v25
  %142 = vmatmul.f32.gmra.mxu0 %v125
  %v143 = vpop.f32.mrf.mxu0
  %v144 = vadd.f32 %v43, %v143
  %145 = vdwg.mxu0
  %v146 = vtanh.pop %v144
  %s147 = scalar_lea.vmem %s0, 16
  %v148 = vld [vmem:[%s147] sm:$0xff]
  %v150 = vsel %vm46, %v120, 0
  %152 = vmatpush.msra.mxu0 0.0
  %153 = vmatpush.msra.mxu0 0.0
  %154 = vmatpush.msra.mxu0 0.0
  %155 = vmatpush.msra.mxu0 0.0
  %156 = vmatpush.msra.mxu0 0.0
  %157 = vmatpush.msra.mxu0 0.0
  %158 = vmatpush.msra.mxu0 0.0
  %159 = vmatpush.msra.mxu0 0.0
  %160 = vmatpush.msra.mxu0 %v24
  %161 = vmatpush.msra.mxu0 %v23
  %162 = vmatpush.msra.mxu0 %v22
  %163 = vmatpush.msra.mxu0 %v21
  %164 = vmatpush.msra.mxu0 %v20
  %165 = vmatpush.msra.mxu0 %v19
  %166 = vmatpush.msra.mxu0 %v18
  %167 = vmatpush.msra.mxu0 %v17
  %168 = vmatmul.f32.gmra.mxu0 %v150
  %v169 = vpop.f32.mrf.mxu0
  %v170 = vadd.f32 0.0, %v169
  %171 = vdwg.mxu0
  %v172 = vadd.f32 %v148, %v170
  %v173 = vtanh.pop %v172
  %175 = vrot.lane.b32.xlu0 %v146, 64
  %v176 = vpop.permute.xlu0 %175
  %v178 = vsel %vm46, %v173, %v176
  %179 = vmatpush.msra.mxu0 %v40
  %180 = vmatpush.msra.mxu0 %v39
  %181 = vmatpush.msra.mxu0 %v38
  %182 = vmatpush.msra.mxu0 %v37
  %183 = vmatpush.msra.mxu0 %v36
  %184 = vmatpush.msra.mxu0 %v35
  %185 = vmatpush.msra.mxu0 %v34
  %186 = vmatpush.msra.mxu0 %v33
  %187 = vmatpush.msra.mxu0 %v32
  %188 = vmatpush.msra.mxu0 %v31
  %189 = vmatpush.msra.mxu0 %v30
  %190 = vmatpush.msra.mxu0 %v29
  %191 = vmatpush.msra.mxu0 %v28
  %192 = vmatpush.msra.mxu0 %v27
  %193 = vmatpush.msra.mxu0 %v26
  %194 = vmatpush.msra.mxu0 %v25
  %195 = vmatmul.f32.gmra.mxu0 %v178
  %v196 = vpop.f32.mrf.mxu0
  %v197 = vadd.f32 %v43, %v196
  %198 = vdwg.mxu0
  %v199 = vtanh.pop %v197
  %s200 = scalar_lea.vmem %s0, 24
  %v201 = vld [vmem:[%s200] sm:$0xff]
  %v203 = vsel %vm46, %v173, 0
  %205 = vmatpush.msra.mxu0 0.0
  %206 = vmatpush.msra.mxu0 0.0
  %207 = vmatpush.msra.mxu0 0.0
  %208 = vmatpush.msra.mxu0 0.0
  %209 = vmatpush.msra.mxu0 0.0
  %210 = vmatpush.msra.mxu0 0.0
  %211 = vmatpush.msra.mxu0 0.0
  %212 = vmatpush.msra.mxu0 0.0
  %213 = vmatpush.msra.mxu0 %v24
  %214 = vmatpush.msra.mxu0 %v23
  %215 = vmatpush.msra.mxu0 %v22
  %216 = vmatpush.msra.mxu0 %v21
  %217 = vmatpush.msra.mxu0 %v20
  %218 = vmatpush.msra.mxu0 %v19
  %219 = vmatpush.msra.mxu0 %v18
  %220 = vmatpush.msra.mxu0 %v17
  %221 = vmatmul.f32.gmra.mxu0 %v203
  %v222 = vpop.f32.mrf.mxu0
  %v223 = vadd.f32 0.0, %v222
  %224 = vdwg.mxu0
  %v225 = vadd.f32 %v201, %v223
  %v226 = vtanh.pop %v225
  %228 = vrot.lane.b32.xlu0 %v199, 64
  %v229 = vpop.permute.xlu0 %228
  %v231 = vsel %vm46, %v226, %v229
  %232 = vmatpush.msra.mxu0 %v40
  %233 = vmatpush.msra.mxu0 %v39
  %234 = vmatpush.msra.mxu0 %v38
  %235 = vmatpush.msra.mxu0 %v37
  %236 = vmatpush.msra.mxu0 %v36
  %237 = vmatpush.msra.mxu0 %v35
  %238 = vmatpush.msra.mxu0 %v34
  %239 = vmatpush.msra.mxu0 %v33
  %240 = vmatpush.msra.mxu0 %v32
  %241 = vmatpush.msra.mxu0 %v31
  %242 = vmatpush.msra.mxu0 %v30
  %243 = vmatpush.msra.mxu0 %v29
  %244 = vmatpush.msra.mxu0 %v28
  %245 = vmatpush.msra.mxu0 %v27
  %246 = vmatpush.msra.mxu0 %v26
  %247 = vmatpush.msra.mxu0 %v25
  %248 = vmatmul.f32.gmra.mxu0 %v231
  %v249 = vpop.f32.mrf.mxu0
  %v250 = vadd.f32 %v43, %v249
  %251 = vdwg.mxu0
  %v252 = vtanh.pop %v250
  %s253 = scalar_lea.vmem %s0, 32
  %v254 = vld [vmem:[%s253] sm:$0xff]
  %v256 = vsel %vm46, %v226, 0
  %258 = vmatpush.msra.mxu0 0.0
  %259 = vmatpush.msra.mxu0 0.0
  %260 = vmatpush.msra.mxu0 0.0
  %261 = vmatpush.msra.mxu0 0.0
  %262 = vmatpush.msra.mxu0 0.0
  %263 = vmatpush.msra.mxu0 0.0
  %264 = vmatpush.msra.mxu0 0.0
  %265 = vmatpush.msra.mxu0 0.0
  %266 = vmatpush.msra.mxu0 %v24
  %267 = vmatpush.msra.mxu0 %v23
  %268 = vmatpush.msra.mxu0 %v22
  %269 = vmatpush.msra.mxu0 %v21
  %270 = vmatpush.msra.mxu0 %v20
  %271 = vmatpush.msra.mxu0 %v19
  %272 = vmatpush.msra.mxu0 %v18
  %273 = vmatpush.msra.mxu0 %v17
  %274 = vmatmul.f32.gmra.mxu0 %v256
  %v275 = vpop.f32.mrf.mxu0
  %v276 = vadd.f32 0.0, %v275
  %277 = vdwg.mxu0
  %v278 = vadd.f32 %v254, %v276
  %v279 = vtanh.pop %v278
  %281 = vrot.lane.b32.xlu0 %v252, 64
  %v282 = vpop.permute.xlu0 %281
  %v284 = vsel %vm46, %v279, %v282
  %285 = vmatpush.msra.mxu0 %v40
  %286 = vmatpush.msra.mxu0 %v39
  %287 = vmatpush.msra.mxu0 %v38
  %288 = vmatpush.msra.mxu0 %v37
  %289 = vmatpush.msra.mxu0 %v36
  %290 = vmatpush.msra.mxu0 %v35
  %291 = vmatpush.msra.mxu0 %v34
  %292 = vmatpush.msra.mxu0 %v33
  %293 = vmatpush.msra.mxu0 %v32
  %294 = vmatpush.msra.mxu0 %v31
  %295 = vmatpush.msra.mxu0 %v30
  %296 = vmatpush.msra.mxu0 %v29
  %297 = vmatpush.msra.mxu0 %v28
  %298 = vmatpush.msra.mxu0 %v27
  %299 = vmatpush.msra.mxu0 %v26
  %300 = vmatpush.msra.mxu0 %v25
  %301 = vmatmul.f32.gmra.mxu0 %v284
  %v302 = vpop.f32.mrf.mxu0
  %v303 = vadd.f32 %v43, %v302
  %304 = vdwg.mxu0
  %v305 = vtanh.pop %v303
  %s306 = scalar_lea.vmem %s0, 40
  %v307 = vld [vmem:[%s306] sm:$0xff]
  %v309 = vsel %vm46, %v279, 0
  %311 = vmatpush.msra.mxu0 0.0
  %312 = vmatpush.msra.mxu0 0.0
  %313 = vmatpush.msra.mxu0 0.0
  %314 = vmatpush.msra.mxu0 0.0
  %315 = vmatpush.msra.mxu0 0.0
  %316 = vmatpush.msra.mxu0 0.0
  %317 = vmatpush.msra.mxu0 0.0
  %318 = vmatpush.msra.mxu0 0.0
  %319 = vmatpush.msra.mxu0 %v24
  %320 = vmatpush.msra.mxu0 %v23
  %321 = vmatpush.msra.mxu0 %v22
  %322 = vmatpush.msra.mxu0 %v21
  %323 = vmatpush.msra.mxu0 %v20
  %324 = vmatpush.msra.mxu0 %v19
  %325 = vmatpush.msra.mxu0 %v18
  %326 = vmatpush.msra.mxu0 %v17
  %327 = vmatmul.f32.gmra.mxu0 %v309
  %v328 = vpop.f32.mrf.mxu0
  %v329 = vadd.f32 0.0, %v328
  %330 = vdwg.mxu0
  %v331 = vadd.f32 %v307, %v329
  %v332 = vtanh.pop %v331
  %334 = vrot.lane.b32.xlu0 %v305, 64
  %v335 = vpop.permute.xlu0 %334
  %v337 = vsel %vm46, %v332, %v335
  %338 = vmatpush.msra.mxu0 %v40
  %339 = vmatpush.msra.mxu0 %v39
  %340 = vmatpush.msra.mxu0 %v38
  %341 = vmatpush.msra.mxu0 %v37
  %342 = vmatpush.msra.mxu0 %v36
  %343 = vmatpush.msra.mxu0 %v35
  %344 = vmatpush.msra.mxu0 %v34
  %345 = vmatpush.msra.mxu0 %v33
  %346 = vmatpush.msra.mxu0 %v32
  %347 = vmatpush.msra.mxu0 %v31
  %348 = vmatpush.msra.mxu0 %v30
  %349 = vmatpush.msra.mxu0 %v29
  %350 = vmatpush.msra.mxu0 %v28
  %351 = vmatpush.msra.mxu0 %v27
  %352 = vmatpush.msra.mxu0 %v26
  %353 = vmatpush.msra.mxu0 %v25
  %354 = vmatmul.f32.gmra.mxu0 %v337
  %v355 = vpop.f32.mrf.mxu0
  %v356 = vadd.f32 %v43, %v355
  %357 = vdwg.mxu0
  %v358 = vtanh.pop %v356
  %s359 = scalar_lea.vmem %s0, 48
  %v360 = vld [vmem:[%s359] sm:$0xff]
  %v362 = vsel %vm46, %v332, 0
  %364 = vmatpush.msra.mxu0 0.0
  %365 = vmatpush.msra.mxu0 0.0
  %366 = vmatpush.msra.mxu0 0.0
  %367 = vmatpush.msra.mxu0 0.0
  %368 = vmatpush.msra.mxu0 0.0
  %369 = vmatpush.msra.mxu0 0.0
  %370 = vmatpush.msra.mxu0 0.0
  %371 = vmatpush.msra.mxu0 0.0
  %372 = vmatpush.msra.mxu0 %v24
  %373 = vmatpush.msra.mxu0 %v23
  %374 = vmatpush.msra.mxu0 %v22
  %375 = vmatpush.msra.mxu0 %v21
  %376 = vmatpush.msra.mxu0 %v20
  %377 = vmatpush.msra.mxu0 %v19
  %378 = vmatpush.msra.mxu0 %v18
  %379 = vmatpush.msra.mxu0 %v17
  %380 = vmatmul.f32.gmra.mxu0 %v362
  %v381 = vpop.f32.mrf.mxu0
  %v382 = vadd.f32 0.0, %v381
  %383 = vdwg.mxu0
  %v384 = vadd.f32 %v360, %v382
  %v385 = vtanh.pop %v384
  %387 = vrot.lane.b32.xlu0 %v358, 64
  %v388 = vpop.permute.xlu0 %387
  %v390 = vsel %vm46, %v385, %v388
  %391 = vmatpush.msra.mxu0 %v40
  %392 = vmatpush.msra.mxu0 %v39
  %393 = vmatpush.msra.mxu0 %v38
  %394 = vmatpush.msra.mxu0 %v37
  %395 = vmatpush.msra.mxu0 %v36
  %396 = vmatpush.msra.mxu0 %v35
  %397 = vmatpush.msra.mxu0 %v34
  %398 = vmatpush.msra.mxu0 %v33
  %399 = vmatpush.msra.mxu0 %v32
  %400 = vmatpush.msra.mxu0 %v31
  %401 = vmatpush.msra.mxu0 %v30
  %402 = vmatpush.msra.mxu0 %v29
  %403 = vmatpush.msra.mxu0 %v28
  %404 = vmatpush.msra.mxu0 %v27
  %405 = vmatpush.msra.mxu0 %v26
  %406 = vmatpush.msra.mxu0 %v25
  %407 = vmatmul.f32.gmra.mxu0 %v390
  %v408 = vpop.f32.mrf.mxu0
  %v409 = vadd.f32 %v43, %v408
  %410 = vdwg.mxu0
  %v411 = vtanh.pop %v409
  %s412 = scalar_lea.vmem %s0, 56
  %v413 = vld [vmem:[%s412] sm:$0xff]
  %v415 = vsel %vm46, %v385, 0
  %417 = vmatpush.msra.mxu0 0.0
  %418 = vmatpush.msra.mxu0 0.0
  %419 = vmatpush.msra.mxu0 0.0
  %420 = vmatpush.msra.mxu0 0.0
  %421 = vmatpush.msra.mxu0 0.0
  %422 = vmatpush.msra.mxu0 0.0
  %423 = vmatpush.msra.mxu0 0.0
  %424 = vmatpush.msra.mxu0 0.0
  %425 = vmatpush.msra.mxu0 %v24
  %426 = vmatpush.msra.mxu0 %v23
  %427 = vmatpush.msra.mxu0 %v22
  %428 = vmatpush.msra.mxu0 %v21
  %429 = vmatpush.msra.mxu0 %v20
  %430 = vmatpush.msra.mxu0 %v19
  %431 = vmatpush.msra.mxu0 %v18
  %432 = vmatpush.msra.mxu0 %v17
  %433 = vmatmul.f32.gmra.mxu0 %v415
  %v434 = vpop.f32.mrf.mxu0
  %v435 = vadd.f32 0.0, %v434
  %436 = vdwg.mxu0
  %v437 = vadd.f32 %v413, %v435
  %v438 = vtanh.pop %v437
  %440 = vrot.lane.b32.xlu0 %v411, 64
  %v441 = vpop.permute.xlu0 %440
  %v443 = vsel %vm46, %v438, %v441
  %444 = vmatpush.msra.mxu0 %v40
  %445 = vmatpush.msra.mxu0 %v39
  %446 = vmatpush.msra.mxu0 %v38
  %447 = vmatpush.msra.mxu0 %v37
  %448 = vmatpush.msra.mxu0 %v36
  %449 = vmatpush.msra.mxu0 %v35
  %450 = vmatpush.msra.mxu0 %v34
  %451 = vmatpush.msra.mxu0 %v33
  %452 = vmatpush.msra.mxu0 %v32
  %453 = vmatpush.msra.mxu0 %v31
  %454 = vmatpush.msra.mxu0 %v30
  %455 = vmatpush.msra.mxu0 %v29
  %456 = vmatpush.msra.mxu0 %v28
  %457 = vmatpush.msra.mxu0 %v27
  %458 = vmatpush.msra.mxu0 %v26
  %459 = vmatpush.msra.mxu0 %v25
  %460 = vmatmul.f32.gmra.mxu0 %v443
  %v461 = vpop.f32.mrf.mxu0
  %v462 = vadd.f32 %v43, %v461
  %463 = vdwg.mxu0
  %v464 = vtanh.pop %v462
  %465 = vst.msk [vmem:[%s4] sm:$0xff] %vm46, %v464
  // Predicated region
  $region18: #{rnn_model_forward.1} parent=0 // pred_check
    _
  $region19: #{rnn_model_forward.1} parent=0 // pred_check_branch
    %467 = sbr.rel (0) target = $region21
  $region20: #{rnn_model_forward.1} parent=0 // pred_region
    _
  $region21: #{rnn_model_forward.1} parent=0 // pred_fallthru
    _
  // Predicated region
  $region22: #{rnn_model_forward.1} parent=0 // pred_check
    _
  $region23: #{rnn_model_forward.1} parent=0 // pred_check_branch
    %469 = sbr.rel (0) target = $region25
  $region24: #{rnn_model_forward.1} parent=0 // pred_region
    _
  $region25: #{rnn_model_forward.1} parent=0 // pred_fallthru
    _

</llo_original>
